<compile_context>
chip_gen: v6e
topology: v6e:2x2x1
jax: 0.10.0
libtpu: 0.0.40
codegen_flags: <defaults>
</compile_context>

<pallas_src>
import math
from functools import partial

import jax
import jax.numpy as jnp
from jax import lax
from jax.experimental import pallas as pl
from jax.experimental.pallas import tpu as pltpu

# Module hyper-parameters (from the PyTorch file)
N_EMBD = 128
BLOCK_SIZE = 256   # max context; the causal mask is generated for the actual T


def _attn_kernel(x_ref, w_ref, o_ref, *, n_heads, head_size, tq):
    """One grid step = one block of `bb` batch elements, all heads.

    x_ref : (bb, T, C)            VMEM, bf16
    w_ref : (C, 3*n_heads*H)      VMEM, bf16, fused [Wq_all*scale | Wk_all | Wv_all]
    o_ref : (bb, T, n_heads*H)    VMEM, bf16
    """
    bb, t, c = x_ref.shape
    nh, h = n_heads, head_size

    # ---- fused QKV projection: one (bb*T, C) @ (C, 3*nh*H) MXU matmul -----
    # Collapsing (bb, T) -> (bb*T) leaves the lane dim (C) untouched, so the
    # reshape is layout-free.  x is already bf16 (cast at the call boundary).
    x2d = x_ref[...].reshape(bb * t, c)
    qkv = jnp.dot(x2d, w_ref[...], preferred_element_type=jnp.float32)
    qkv = qkv.reshape(bb, t, 3 * nh * h)

    # 1/sqrt(H) is already folded into Wq (wrapper), so no extra scaling here.
    q_all = qkv[:, :, 0 * nh * h:1 * nh * h].astype(jnp.bfloat16)
    k_all = qkv[:, :, 1 * nh * h:2 * nh * h].astype(jnp.bfloat16)
    v_all = qkv[:, :, 2 * nh * h:3 * nh * h].astype(jnp.bfloat16)

    # ---- causal attention, tiled over query blocks -------------------------
    # Each query block only ever sees keys [0, q_lo + tq), so fully-masked key
    # blocks are never computed (scores, exp, PV all skipped).
    n_qblk = t // tq
    for qi in range(n_qblk):
        q_lo = qi * tq
        kv_hi = q_lo + tq                     # visible keys for this block

        row = lax.broadcasted_iota(jnp.int32, (tq, kv_hi), 0) + q_lo
        col = lax.broadcasted_iota(jnp.int32, (tq, kv_hi), 1)
        # additive causal mask, hoisted out of the head loop
        neg_mask = jnp.where(col <= row, 0.0, -jnp.inf)[None, :, :]

        head_outs = []
        for hd in range(nh):
            q = q_all[:, q_lo:q_lo + tq, hd * h:(hd + 1) * h]
            k = k_all[:, 0:kv_hi, hd * h:(hd + 1) * h]
            v = v_all[:, 0:kv_hi, hd * h:(hd + 1) * h]

            # Contraction dim is only H=32 (inherently MXU-starved); the fix
            # is issuing many of these back-to-back (head fusion + bb), not
            # zero-padding the contraction.
            wei = jnp.einsum('bqd,bkd->bqk', q, k,
                             preferred_element_type=jnp.float32)
            wei = wei + neg_mask

            # Numerically-stable softmax: f32 on VPU/EUP (correct on v5e too;
            # a bf16 exp is a v6e/v7x-only option if the EUP slot saturates),
            # denominator reciprocal on the otherwise-idle EUP slot.
            wei = wei - jnp.max(wei, axis=-1, keepdims=True)
            p = jnp.exp(wei)
            p = p * pl.reciprocal(jnp.sum(p, axis=-1, keepdims=True),
                                  approx=True)

            # dropout(p=0.2): identity in eval mode.

            head_outs.append(
                jnp.einsum('bqk,bkd->bqd', p.astype(jnp.bfloat16), v,
                           preferred_element_type=jnp.float32))

        # Lane-dense (nh*H wide) store of this query block.
        o_ref[:, q_lo:q_lo + tq, :] = jnp.concatenate(
            head_outs, axis=-1).astype(o_ref.dtype)


def _pick_batch_block(B, max_bb):
    """Largest divisor of B that is <= max_bb, while keeping >= 2 grid steps
    whenever B >= 2 (so v7x's two TensorCores both get work)."""
    limit = max(1, min(max_bb, B // 2)) if B >= 2 else 1
    for bb in range(limit, 0, -1):
        if B % bb == 0:
            return bb
    return 1


def _attention_forward(x, w_fused, *, n_heads, head_size, max_bb):
    """x: (B, T, C); w_fused: (C, 3*n_heads*head_size) bf16."""
    B, T, C = x.shape
    assert C == N_EMBD and T <= BLOCK_SIZE

    bb = _pick_batch_block(B, max_bb)
    tq = 128 if (T % 128 == 0) else T          # query-block tile
    grid = (B // bb,)

    kernel = partial(_attn_kernel, n_heads=n_heads, head_size=head_size, tq=tq)
    x_bf = x.astype(jnp.bfloat16)              # halve the dominant input DMA

    return pl.pallas_call(
        kernel,
        out_shape=jax.ShapeDtypeStruct((B, T, n_heads * head_size),
                                       jnp.bfloat16),
        grid_spec=pltpu.PrefetchScalarGridSpec(
            num_scalar_prefetch=0,
            grid=grid,
            in_specs=[
                pl.BlockSpec((bb, T, C), lambda b: (b, 0, 0)),
                pl.BlockSpec((C, 3 * n_heads * head_size), lambda b: (0, 0)),
            ],
            out_specs=pl.BlockSpec((bb, T, n_heads * head_size),
                                   lambda b: (b, 0, 0)),
        ),
        compiler_params=pltpu.CompilerParams(
            dimension_semantics=("parallel",),
            # explicit limit: above v5e's 16 MiB scoped default, within v7x's
            # 64 MiB physical VMEM; live set per step is only a few MiB.
            vmem_limit_bytes=32 * 1024 * 1024),
    )(x_bf, w_fused)


def head_forward(x, w_key, w_query, w_value):
    """Single `Head` (matches the PyTorch module exactly, eval mode).

    x: (B, T, C); w_*: (head_size, n_embd) PyTorch-layout weights.
    Returns (B, T, head_size) in bf16.
    """
    head_size = w_key.shape[0]
    scale = head_size ** (-0.5)
    w_fused = jnp.concatenate(
        [w_query.T * scale, w_key.T, w_value.T], axis=1).astype(jnp.bfloat16)
    return _attention_forward(x, w_fused, n_heads=1, head_size=head_size,
                              max_bb=8)


def fused_heads_forward(x, w_keys, w_queries, w_values):
    """All heads of the surrounding model fused into one kernel.

    Semantically identical to concatenating the outputs of `n_heads`
    independent `Head` modules along the last axis (the review's
    lane-density optimization).

    x: (B, T, C); w_*: (n_heads, head_size, n_embd).
    Returns (B, T, n_heads*head_size) in bf16.
    """
    n_heads, head_size, C = w_keys.shape
    scale = head_size ** (-0.5)
    wq = jnp.concatenate([w_queries[i].T for i in range(n_heads)], axis=1) * scale
    wk = jnp.concatenate([w_keys[i].T for i in range(n_heads)], axis=1)
    wv = jnp.concatenate([w_values[i].T for i in range(n_heads)], axis=1)
    w_fused = jnp.concatenate([wq, wk, wv], axis=1).astype(jnp.bfloat16)
    # bb capped at 4 for the fused path (v7x VMEM headroom).
    return _attention_forward(x, w_fused, n_heads=n_heads,
                              head_size=head_size, max_bb=4)


def _reference(x, w_key, w_query, w_value):
    """Pure-JAX f32 reference mirroring the PyTorch forward (eval mode)."""
    k = x @ w_key.T
    q = x @ w_query.T
    v = x @ w_value.T
    wei = (q @ jnp.swapaxes(k, -2, -1)) * (k.shape[-1] ** -0.5)
    T = x.shape[1]
    tril = jnp.tril(jnp.ones((T, T), dtype=bool))
    wei = jnp.where(tril, wei, -jnp.inf)
    wei = jax.nn.softmax(wei, axis=-1)
    return wei @ v


if __name__ == "__main__":
    key = jax.random.PRNGKey(0)
    head_size = 32
    C = N_EMBD
    bound = 1.0 / math.sqrt(C)

    # ---------------- test 1: single Head (module semantics), small T ------
    B, T = 2, 8
    kx, kk, kq, kv, key = jax.random.split(key, 5)
    x = jax.random.normal(kx, (B, T, C), dtype=jnp.float32)
    w_key_p = jax.random.uniform(kk, (head_size, C), jnp.float32, -bound, bound)
    w_query_p = jax.random.uniform(kq, (head_size, C), jnp.float32, -bound, bound)
    w_value_p = jax.random.uniform(kv, (head_size, C), jnp.float32, -bound, bound)

    out = head_forward(x, w_key_p, w_query_p, w_value_p)
    out = jax.block_until_ready(out)
    ref = _reference(x, w_key_p, w_query_p, w_value_p)
    assert out.shape == (B, T, head_size)
    # bf16 activations/outputs with f32 accumulation -> loosened tolerance.
    assert jnp.allclose(out.astype(jnp.float32), ref, atol=4e-2, rtol=4e-2), \
        "single-head mismatch vs reference"

    # ---------------- test 2: fused 4 heads, full context T=256 ------------
    # (exercises the causal query-block tiling and the lane-dense 128-wide
    #  output path recommended by the performance review)
    n_heads = N_EMBD // head_size           # 4
    B2, T2 = 2, BLOCK_SIZE
    kx2, kk2, kq2, kv2, key = jax.random.split(key, 5)
    x2 = jax.random.normal(kx2, (B2, T2, C), dtype=jnp.float32)
    w_keys = jax.random.uniform(kk2, (n_heads, head_size, C), jnp.float32,
                                -bound, bound)
    w_queries = jax.random.uniform(kq2, (n_heads, head_size, C), jnp.float32,
                                   -bound, bound)
    w_values = jax.random.uniform(kv2, (n_heads, head_size, C), jnp.float32,
                                  -bound, bound)

    out2 = fused_heads_forward(x2, w_keys, w_queries, w_values)
    out2 = jax.block_until_ready(out2)
    ref2 = jnp.concatenate(
        [_reference(x2, w_keys[i], w_queries[i], w_values[i])
         for i in range(n_heads)], axis=-1)
    assert out2.shape == (B2, T2, n_heads * head_size)
    assert jnp.allclose(out2.astype(jnp.float32), ref2, atol=4e-2, rtol=4e-2), \
        "fused-heads mismatch vs reference"

    print("KERNEL_OK")
</pallas_src>

<mosaic_0001>
module attributes {stable_mosaic.version = 11 : i64} {
  func.func @_attn_kernel(%arg0: i32, %arg1: memref<1x8x128xbf16, #tpu.memory_space<vmem>>, %arg2: memref<128x96xbf16, #tpu.memory_space<vmem>>, %arg3: memref<1x8x32xbf16, #tpu.memory_space<vmem>>) attributes {dimension_semantics = [#tpu.dimension_semantics<parallel>], iteration_bounds = array<i64: 2>, scalar_prefetch = 0 : i64, scratch_operands = 0 : i64, tpu.core_type = #tpu.core_type<tc>, window_params = [{transform_indices = @transform_0, window_bounds = array<i64: 1, 8, 128>}, {pipeline_mode = #tpu.pipeline_mode<synchronous>, transform_indices = @transform_1, window_bounds = array<i64: 128, 96>}, {transform_indices = @transform_2, window_bounds = array<i64: 1, 8, 32>}]} {
    %c0 = arith.constant 0 : index
    %c0_0 = arith.constant 0 : index
    %c0_1 = arith.constant 0 : index
    %0 = vector.load %arg1[%c0, %c0_0, %c0_1] : memref<1x8x128xbf16, #tpu.memory_space<vmem>>, vector<1x8x128xbf16>
    %1 = vector.shape_cast %0 : vector<1x8x128xbf16> to vector<8x128xbf16>
    %c0_2 = arith.constant 0 : index
    %c0_3 = arith.constant 0 : index
    %2 = vector.load %arg2[%c0_2, %c0_3] : memref<128x96xbf16, #tpu.memory_space<vmem>>, vector<128x96xbf16>
    %cst = arith.constant dense<0.000000e+00> : vector<8x96xf32>
    %3 = tpu.matmul %1, %2, %cst {dimension_numbers = #tpu.dot_dimension_numbers<[1], [0], [0], [1], [0, 0, 1, 1], [], []>} : vector<8x128xbf16>, vector<128x96xbf16>, vector<8x96xf32> -> vector<8x96xf32>
    %4 = vector.shape_cast %3 : vector<8x96xf32> to vector<1x8x96xf32>
    %5 = vector.extract_strided_slice %4 {offsets = [0, 0, 0], sizes = [1, 8, 32], strides = [1, 1, 1]} : vector<1x8x96xf32> to vector<1x8x32xf32>
    %6 = arith.truncf %5 : vector<1x8x32xf32> to vector<1x8x32xbf16>
    %7 = vector.extract_strided_slice %4 {offsets = [0, 0, 32], sizes = [1, 8, 32], strides = [1, 1, 1]} : vector<1x8x96xf32> to vector<1x8x32xf32>
    %8 = arith.truncf %7 : vector<1x8x32xf32> to vector<1x8x32xbf16>
    %9 = vector.extract_strided_slice %4 {offsets = [0, 0, 64], sizes = [1, 8, 32], strides = [1, 1, 1]} : vector<1x8x96xf32> to vector<1x8x32xf32>
    %10 = arith.truncf %9 : vector<1x8x32xf32> to vector<1x8x32xbf16>
    %11 = tpu.iota {dimensions = array<i32: 0>} : vector<8x8xi32>
    %c0_i32 = arith.constant 0 : i32
    %12 = vector.broadcast %c0_i32 : i32 to vector<8x8xi32>
    %13 = arith.addi %11, %12 : vector<8x8xi32>
    %14 = tpu.iota {dimensions = array<i32: 1>} : vector<8x8xi32>
    %15 = arith.cmpi sle, %14, %13 : vector<8x8xi32>
    %cst_4 = arith.constant 0.000000e+00 : f32
    %cst_5 = arith.constant 0xFF800000 : f32
    %16 = vector.broadcast %cst_4 : f32 to vector<8x8xf32>
    %17 = vector.broadcast %cst_5 : f32 to vector<8x8xf32>
    %18 = arith.select %15, %16, %17 : vector<8x8xi1>, vector<8x8xf32>
    %19 = vector.shape_cast %18 : vector<8x8xf32> to vector<1x8x8xf32>
    "tpu.trace_start"() <{level = 10 : i32, message = "bqd,bkd->bqk"}> : () -> ()
    %cst_6 = arith.constant dense<0.000000e+00> : vector<1x8x8xf32>
    %20 = tpu.matmul %6, %8, %cst_6 {dimension_numbers = #tpu.dot_dimension_numbers<[2], [2], [1], [1], [0, 0, 0, 1, 1, 1], [0], [0]>} : vector<1x8x32xbf16>, vector<1x8x32xbf16>, vector<1x8x8xf32> -> vector<1x8x8xf32>
    "tpu.trace_stop"() : () -> ()
    %21 = arith.addf %20, %19 : vector<1x8x8xf32>
    %cst_7 = arith.constant dense<0xFF800000> : vector<1x8xf32>
    %22 = vector.multi_reduction <maximumf>, %21, %cst_7 [2] : vector<1x8x8xf32> to vector<1x8xf32>
    %23 = vector.shape_cast %22 : vector<1x8xf32> to vector<1x8x1xf32>
    %24 = vector.broadcast %23 : vector<1x8x1xf32> to vector<1x8x8xf32>
    %25 = arith.subf %21, %24 : vector<1x8x8xf32>
    %26 = math.exp %25 : vector<1x8x8xf32>
    %cst_8 = arith.constant dense<0.000000e+00> : vector<1x8xf32>
    %27 = vector.multi_reduction <add>, %26, %cst_8 [2] : vector<1x8x8xf32> to vector<1x8xf32>
    %28 = vector.shape_cast %27 : vector<1x8xf32> to vector<1x8x1xf32>
    %29 = tpu.reciprocal %28 {approx = true} : vector<1x8x1xf32> -> vector<1x8x1xf32>
    %30 = vector.broadcast %29 : vector<1x8x1xf32> to vector<1x8x8xf32>
    %31 = arith.mulf %26, %30 : vector<1x8x8xf32>
    %32 = arith.truncf %31 : vector<1x8x8xf32> to vector<1x8x8xbf16>
    "tpu.trace_start"() <{level = 10 : i32, message = "bqk,bkd->bqd"}> : () -> ()
    %cst_9 = arith.constant dense<0.000000e+00> : vector<1x8x32xf32>
    %33 = tpu.matmul %32, %10, %cst_9 {dimension_numbers = #tpu.dot_dimension_numbers<[2], [1], [1], [2], [0, 0, 0, 1, 1, 2], [0], [0]>} : vector<1x8x8xbf16>, vector<1x8x32xbf16>, vector<1x8x32xf32> -> vector<1x8x32xf32>
    "tpu.trace_stop"() : () -> ()
    %34 = arith.truncf %33 : vector<1x8x32xf32> to vector<1x8x32xbf16>
    %c0_10 = arith.constant 0 : index
    %c0_11 = arith.constant 0 : index
    %c0_12 = arith.constant 0 : index
    %35 = vector.load %arg3[%c0_10, %c0_11, %c0_12] : memref<1x8x32xbf16, #tpu.memory_space<vmem>>, vector<1x8x32xbf16>
    tpu.vector_store %arg3[%c0_10, %c0_11, %c0_12], %34 {strides = array<i32>} : memref<1x8x32xbf16, #tpu.memory_space<vmem>>, vector<1x8x32xbf16>,
    return
  }
  func.func @transform_0(%arg0: i32) -> (i32, i32, i32) {
    %c0_i32 = arith.constant 0 : i32
    %c0_i32_0 = arith.constant 0 : i32
    %c0_i32_1 = arith.constant 0 : i32
    return %arg0, %c0_i32, %c0_i32_0 : i32, i32, i32
  }
  func.func @transform_1(%arg0: i32) -> (i32, i32) {
    %c0_i32 = arith.constant 0 : i32
    %c0_i32_0 = arith.constant 0 : i32
    %c0_i32_1 = arith.constant 0 : i32
    return %c0_i32, %c0_i32_0 : i32, i32
  }
  func.func @transform_2(%arg0: i32) -> (i32, i32, i32) {
    %c0_i32 = arith.constant 0 : i32
    %c0_i32_0 = arith.constant 0 : i32
    %c0_i32_1 = arith.constant 0 : i32
    return %arg0, %c0_i32, %c0_i32_0 : i32, i32, i32
  }
}

</mosaic_0001>

<llo_original>
// kernel: tpu_custom_call.1
$region0: #{tpu_custom_call.1}
  #allocation0 [shape = 'u32[]', space=smem, size = 0x4, offset = 0x4, fixed_abs, tag = 'smem constant byte address 0x4 - core index']
  #allocation1 [shape = 'u32[144,128]{1,0:T(1,128)}', space=vmem, size = 0x12000, scoped, tag = 'internal scratch']
  %s0 = inlined_call_operand.vmem [shape: bf16[2,8,128], index: 0, kind: input, shape index: {}]
  %s1 = inlined_call_operand.vmem [shape: bf16[128,96], index: 1, kind: input, shape index: {}]
  %s2 = inlined_call_operand.hbm [shape: bf16[2,8,32], index: 2, kind: output, shape index: {}]
  %s3 = sld [smem:[#allocation0]]
  $region41: #{tpu_custom_call.1} parent=0
    _
  %s5 = ssub.s32 1, %s3
  %s6 = scalar_select 0, %s5, %s3
  $region1: #{tpu_custom_call.1} parent=0
    #allocation2 [shape = 'u8[4096]{0}', space=vmem, size = 0x1000, scoped, tag = 'output window, operand 0']
    #allocation3 [shape = 's32[2]{0}', space=sflag, size = 0x8, scoped, tag = 'scoped memory for tpu_custom_call.1']
    %7 = vsyncpa [#allocation3], 0
    %s8 = scalar_lea.sflag [#allocation3], 1
    %9 = vsyncpa %s8, 0
    loop: start=0, step=1, limit=4
    $region2: #{tpu_custom_call.1} parent=1 // loop_pre_header
      _
    $region3: #{tpu_custom_call.1} parent=1 // loop_header
      %s11 = sphi 0, %s15
      %p12 = scmp.ge.s32.totalorder %s11, 4
      %s21 = sphi 0, %s23
      %s24 = sphi 0, %s21
      %s25 = sphi 0, %s24
      %s41 = sphi 0, %s25
      %s45 = sphi 0, %s45
      %s47 = sphi 0, %s45
      %s48 = sphi 0, %s47
      %s62 = sphi 0, %s48
      %s68 = sphi 0, %s70
      %s71 = sphi 0, %s68
      %s72 = sphi 0, %s71
      %s88 = sphi 0, %s72
    $region4: #{tpu_custom_call.1} parent=1 // loop_header_branch
      %14 = sbr.rel (%p12) target = $region8
    $region5: #{tpu_custom_call.1} parent=1 // loop_body
      %s16 = ssub.s32 %s11, 1
      %s17 = ssub.s32 %s11, 2
      %s18 = sadd.s32 %s11, 1
      %s19 = ssub.s32 %s11, %s18
      %p20 = scmp.eq.s32.totalorder %s19, 0
      %s22 = sadd.s32 %s21, 1
      %s23 = scalar_select %p20, %s21, %s22
      %p26 = pneg %p20
      %p27 = scmp.eq.s32.totalorder %s11, 1
      %p28 = por %p26, %p27
      %p29 = scmp.ne.s32.totalorder %s21, %s24
      %p30 = scmp.eq.s32.totalorder %s11, 0
      %p31 = por %p29, %p30
      %p32 = scmp.ne.s32.totalorder %s21, %s24
      %p33 = scmp.eq.s32.totalorder %s16, 1
      %p34 = por %p32, %p33
      %p35 = scmp.ne.s32.totalorder %s24, %s25
      %p36 = scmp.eq.s32.totalorder %s16, 0
      %p37 = por %p35, %p36
      %p38 = scmp.ne.s32.totalorder %s24, %s25
      %p39 = scmp.eq.s32.totalorder %s17, 1
      %p40 = por %p38, %p39
      %p42 = scmp.ne.s32.totalorder %s25, %s41
      %p43 = scmp.eq.s32.totalorder %s17, 0
      %p44 = por %p42, %p43
      %s46 = sadd.s32 %s45, 1
      %p49 = scmp.eq.s32.totalorder %s11, 1
      %p50 = scmp.ne.s32.totalorder %s45, %s47
      %p51 = scmp.eq.s32.totalorder %s11, 0
      %p52 = por %p50, %p51
      %p53 = scmp.ne.s32.totalorder %s45, %s47
      %p54 = scmp.eq.s32.totalorder %s16, 1
      %p55 = por %p53, %p54
      %p56 = scmp.ne.s32.totalorder %s47, %s48
      %p57 = scmp.eq.s32.totalorder %s16, 0
      %p58 = por %p56, %p57
      %p59 = scmp.ne.s32.totalorder %s47, %s48
      %p60 = scmp.eq.s32.totalorder %s17, 1
      %p61 = por %p59, %p60
      %p63 = scmp.ne.s32.totalorder %s48, %s62
      %p64 = scmp.eq.s32.totalorder %s17, 0
      %p65 = por %p63, %p64
      %s66 = ssub.s32 %s11, %s18
      %p67 = scmp.eq.s32.totalorder %s66, 0
      %s69 = sadd.s32 %s68, 1
      %s70 = scalar_select %p67, %s68, %s69
      %p73 = pneg %p67
      %p74 = scmp.eq.s32.totalorder %s11, 1
      %p75 = por %p73, %p74
      %p76 = scmp.ne.s32.totalorder %s68, %s71
      %p77 = scmp.eq.s32.totalorder %s11, 0
      %p78 = por %p76, %p77
      %p79 = scmp.ne.s32.totalorder %s68, %s71
      %p80 = scmp.eq.s32.totalorder %s16, 1
      %p81 = por %p79, %p80
      %p82 = scmp.ne.s32.totalorder %s71, %s72
      %p83 = scmp.eq.s32.totalorder %s16, 0
      %p84 = por %p82, %p83
      %p85 = scmp.ne.s32.totalorder %s71, %s72
      %p86 = scmp.eq.s32.totalorder %s17, 1
      %p87 = por %p85, %p86
      %p89 = scmp.ne.s32.totalorder %s72, %s88
      %p90 = scmp.eq.s32.totalorder %s17, 0
      %p91 = por %p89, %p90
      %p92 = scmp.le.s32.totalorder 1, %s11
      %p93 = scmp.lt.s32.totalorder %s11, 3
      %p94 = pnand %p92, %p93
      %p95 = pneg %p94
      // Predicated region
      $region9: #{tpu_custom_call.1} parent=5 // pred_check
        _
      $region10: #{tpu_custom_call.1} parent=5 // pred_check_branch
        %97 = sbr.rel (%p94) target = $region12
      $region11: #{tpu_custom_call.1} parent=5 // pred_region
        %s98 = ssub.s32 %s11, 1
        // Predicated region
        $region13: #{tpu_custom_call.1} parent=11 // pred_check
          %p99 = pneg %p58
        $region14: #{tpu_custom_call.1} parent=11 // pred_check_branch
          %101 = sbr.rel (%p99) target = $region16
        $region15: #{tpu_custom_call.1} parent=11 // pred_region
          _
        $region16: #{tpu_custom_call.1} parent=11 // pred_fallthru
          _
      $region12: #{tpu_custom_call.1} parent=5 // pred_fallthru
        _
      %p102 = scmp.lt.s32.totalorder %s11, 2
      // Predicated region
      $region17: #{tpu_custom_call.1} parent=5 // pred_check
        %p103 = pneg %p102
      $region18: #{tpu_custom_call.1} parent=5 // pred_check_branch
        %105 = sbr.rel (%p103) target = $region20
      $region19: #{tpu_custom_call.1} parent=5 // pred_region
        // Predicated region
        $region21: #{tpu_custom_call.1} parent=19 // pred_check
          %p106 = pneg %p31
        $region22: #{tpu_custom_call.1} parent=19 // pred_check_branch
          %108 = sbr.rel (%p106) target = $region24
        $region23: #{tpu_custom_call.1} parent=19 // pred_region
          %p109 = scmp.lt.s32.totalorder %s11, 1
          %s110 = scalar_select %p109, %s11, 1
          %s111 = smul.addr %s110, 4
          %s112 = scalar_lea.vmem %s0, %s111
        $region24: #{tpu_custom_call.1} parent=19 // pred_fallthru
          _
      $region20: #{tpu_custom_call.1} parent=5 // pred_fallthru
        _
      %p113 = scmp.le.s32.totalorder 1, %s11
      %p114 = scmp.lt.s32.totalorder %s11, 3
      %p115 = pnand %p113, %p114
      %p116 = pneg %p115
      // Predicated region
      $region25: #{tpu_custom_call.1} parent=5 // pred_check
        _
      $region26: #{tpu_custom_call.1} parent=5 // pred_check_branch
        %118 = sbr.rel (%p115) target = $region28
      $region27: #{tpu_custom_call.1} parent=5 // pred_region
        %s119 = ssub.s32 %s11, 1
        %p120 = scmp.lt.s32.totalorder %s16, 1
        %s121 = scalar_select %p120, %s16, 1
        %s122 = smul.addr %s121, 4
        %s123 = scalar_lea.vmem %s0, %s122
        %p124 = pneg %p37
        %p125 = pneg %p34
        %p126 = pneg %p58
        %p127 = pneg %p55
        %p128 = pneg %p84
        %p129 = pneg %p81
        %s130 = sand.u32 %s71, 1
        %s131 = scalar_lea.sflag [#allocation3], %s130
        %s132 = sand.u32 %s71, 1
        %s133 = smul.addr %s132, 4
        %s134 = scalar_lea.vmem [#allocation2], %s133
        %p135 = scmp.lt.s32.totalorder %s16, 1
        %s136 = scalar_select %p135, %s16, 1
        %s137 = smul.addr %s136, 4
        %s138 = scalar_lea.vmem %s0, %s137
        %v140 = vld [vmem:[%s138] sm:$0xf]
        %v141 = vld [vmem:[%s1] sm:$0xf]
        %v142 = vld [vmem:[%s1 + $0x4] sm:$0xf]
        %v143 = vld [vmem:[%s1 + $0x8] sm:$0xf]
        %v144 = vld [vmem:[%s1 + $0xc] sm:$0xf]
        %v145 = vld [vmem:[%s1 + $0x10] sm:$0xf]
        %v146 = vld [vmem:[%s1 + $0x14] sm:$0xf]
        %v147 = vld [vmem:[%s1 + $0x18] sm:$0xf]
        %v148 = vld [vmem:[%s1 + $0x1c] sm:$0xf]
        %v149 = vld [vmem:[%s1 + $0x20] sm:$0xf]
        %v150 = vld [vmem:[%s1 + $0x24] sm:$0xf]
        %v151 = vld [vmem:[%s1 + $0x28] sm:$0xf]
        %v152 = vld [vmem:[%s1 + $0x2c] sm:$0xf]
        %v153 = vld [vmem:[%s1 + $0x30] sm:$0xf]
        %v154 = vld [vmem:[%s1 + $0x34] sm:$0xf]
        %v155 = vld [vmem:[%s1 + $0x38] sm:$0xf]
        %v156 = vld [vmem:[%s1 + $0x3c] sm:$0xf]
        %v173 = vunpack.c.l.b16 %v141
        %v174 = vunpack.c.l.b16 %v142
        %v175 = vunpack.c.l.b16 %v143
        %v176 = vunpack.c.l.b16 %v144
        %v177 = vunpack.c.l.b16 %v145
        %v178 = vunpack.c.l.b16 %v146
        %v179 = vunpack.c.l.b16 %v147
        %v180 = vunpack.c.l.b16 %v148
        %v181 = vunpack.c.l.b16 %v149
        %v182 = vunpack.c.l.b16 %v150
        %v183 = vunpack.c.l.b16 %v151
        %v184 = vunpack.c.l.b16 %v152
        %v185 = vunpack.c.l.b16 %v153
        %v186 = vunpack.c.l.b16 %v154
        %v187 = vunpack.c.l.b16 %v155
        %v188 = vunpack.c.l.b16 %v156
        %v189 = vpack.c.b16 %v174, %v173
        %v190 = vpack.c.b16 %v176, %v175
        %v191 = vpack.c.b16 %v178, %v177
        %v192 = vpack.c.b16 %v180, %v179
        %v193 = vpack.c.b16 %v182, %v181
        %v194 = vpack.c.b16 %v184, %v183
        %v195 = vpack.c.b16 %v186, %v185
        %v196 = vpack.c.b16 %v188, %v187
        %205 = vmatprep.subr.bf16.mxu0 0
        %206 = vmatpush1.bf16.msra.mxu0 %v196
        %207 = vmatprep.subr.bf16.mxu0 0
        %208 = vmatpush1.bf16.msra.mxu0 %v195
        %209 = vmatprep.subr.bf16.mxu0 0
        %210 = vmatpush1.bf16.msra.mxu0 %v194
        %211 = vmatprep.subr.bf16.mxu0 0
        %212 = vmatpush1.bf16.msra.mxu0 %v193
        %213 = vmatprep.subr.bf16.mxu0 0
        %214 = vmatpush1.bf16.msra.mxu0 %v192
        %215 = vmatprep.subr.bf16.mxu0 0
        %216 = vmatpush1.bf16.msra.mxu0 %v191
        %217 = vmatprep.subr.bf16.mxu0 0
        %218 = vmatpush1.bf16.msra.mxu0 %v190
        %219 = vmatprep.subr.bf16.mxu0 0
        %220 = vmatpush1.bf16.msra.mxu0 %v189
        %221 = vmatprep.subr.bf16.mxu0 0
        %222 = vmatpush2.bf16.msra.mxu0 0
        %223 = vmatprep.subr.bf16.mxu0 0
        %224 = vmatpush2.bf16.msra.mxu0 0
        %225 = vmatprep.subr.bf16.mxu0 0
        %226 = vmatpush2.bf16.msra.mxu0 0
        %227 = vmatprep.subr.bf16.mxu0 0
        %228 = vmatpush2.bf16.msra.mxu0 0
        %229 = vmatprep.subr.bf16.mxu0 0
        %230 = vmatpush2.bf16.msra.mxu0 0
        %231 = vmatprep.subr.bf16.mxu0 0
        %232 = vmatpush2.bf16.msra.mxu0 0
        %233 = vmatprep.subr.bf16.mxu0 0
        %234 = vmatpush2.bf16.msra.mxu0 0
        %235 = vmatprep.subr.bf16.mxu0 0
        %236 = vmatpush2.bf16.msra.mxu0 0
        %237 = vmatprep.mubr.bf16.mxu0 0
        %238 = vmatmul.mubr.bf16.gmra.mxu0 %v140
        %v239 = vpop.f32.mrf.mxu0
        %v240 = vadd.f32 0.0, %v239
        %v241 = vpop.f32.mrf.mxu0
        %v242 = vpop.f32.mrf.mxu0
        %v243 = vpop.f32.mrf.mxu0
        %244 = vdwg.mxu0
        %v245 = vpack.c.bf16 %v240, %v240
        %v246 = vlaneseq
        %v247 = vshrl.u32 %v246, 7
        %v248 = vlaneseq
        %v249 = vand.u32 %v248, 127
        %vm250 = vcmp.le.s32.totalorder %v249, %v247
        %v251 = vsel %vm250, 0.0, -inf
        %253 = vrot.lane.b32.xlu0 %v245, 96
        %v254 = vpop.permute.xlu0 %253
        %vm255 = vcmask 261120
        %v257 = vsel %vm255, %v245, 0
        %v260 = vsel %vm255, %v254, 0
        %262 = vmatprep.subr.bf16.mxu0 0
        %263 = vmatpush1.bf16.xpose.msra.mxu0 0
        %264 = vmatprep.subr.bf16.mxu0 0
        %265 = vmatpush1.bf16.xpose.msra.mxu0 0
        %266 = vmatprep.subr.bf16.mxu0 0
        %267 = vmatpush1.bf16.xpose.msra.mxu0 0
        %268 = vmatprep.subr.bf16.mxu0 0
        %269 = vmatpush1.bf16.xpose.msra.mxu0 0
        %270 = vmatprep.subr.bf16.mxu0 0
        %271 = vmatpush1.bf16.xpose.msra.mxu0 0
        %272 = vmatprep.subr.bf16.mxu0 0
        %273 = vmatpush1.bf16.xpose.msra.mxu0 0
        %274 = vmatprep.subr.bf16.mxu0 0
        %275 = vmatpush1.bf16.xpose.msra.mxu0 0
        %276 = vmatprep.subr.bf16.mxu0 0
        %277 = vmatpush1.bf16.xpose.msra.mxu0 %v260
        %278 = vmatprep.subr.bf16.mxu0 0
        %279 = vmatpush2.bf16.xpose.msra.mxu0 0
        %280 = vmatprep.subr.bf16.mxu0 0
        %281 = vmatpush2.bf16.xpose.msra.mxu0 0
        %282 = vmatprep.subr.bf16.mxu0 0
        %283 = vmatpush2.bf16.xpose.msra.mxu0 0
        %284 = vmatprep.subr.bf16.mxu0 0
        %285 = vmatpush2.bf16.xpose.msra.mxu0 0
        %286 = vmatprep.subr.bf16.mxu0 0
        %287 = vmatpush2.bf16.xpose.msra.mxu0 0
        %288 = vmatprep.subr.bf16.mxu0 0
        %289 = vmatpush2.bf16.xpose.msra.mxu0 0
        %290 = vmatprep.subr.bf16.mxu0 0
        %291 = vmatpush2.bf16.xpose.msra.mxu0 0
        %292 = vmatprep.subr.bf16.mxu0 0
        %293 = vmatpush2.bf16.xpose.msra.mxu0 0
        %294 = vmatprep.mubr.bf16.mxu0 0
        %295 = vmatmul.mubr.bf16.gmra.mxu0 %v257
        %v296 = vpop.f32.mrf.mxu0
        %v297 = vadd.f32 %v251, %v296
        %v298 = vpop.f32.mrf.mxu0
        %v299 = vpop.f32.mrf.mxu0
        %v300 = vpop.f32.mrf.mxu0
        %301 = vdwg.mxu0
        %vm302 = vcmask 64512
        %v303 = vsel %vm302, %v297, -inf
        %304 = vmax.xlane.f32.xlu0 %v303
        %v305 = vpop.xlane.xlu0 %304
        %v306 = vsub.f32 %v297, %v305
        %v307 = vmul.f32 %v306, 1.442695
        %v308 = vpow.pop %v307
        %v309 = vsel %vm302, %v308, 0.0
        %310 = vadd.xlane.f32.xlu0 %v309
        %v311 = vpop.xlane.xlu0 %310
        %v312 = vrcp.pop %v311
        %v313 = vmul.f32 %v308, %v312
        %v314 = vpack.c.bf16 %v313, %v313
        %315 = vrot.lane.b32.xlu0 %v245, 64
        %v316 = vpop.permute.xlu0 %315
        %v318 = vsel %vm302, %v314, 0
        %vm320 = vcmask 1043456
        %v322 = vsel %vm320, %v316, 0
        %324 = vmatprep.subr.bf16.mxu0 0
        %325 = vmatpush1.bf16.msra.mxu0 0
        %326 = vmatprep.subr.bf16.mxu0 0
        %327 = vmatpush1.bf16.msra.mxu0 0
        %328 = vmatprep.subr.bf16.mxu0 0
        %329 = vmatpush1.bf16.msra.mxu0 0
        %330 = vmatprep.subr.bf16.mxu0 0
        %331 = vmatpush1.bf16.msra.mxu0 0
        %332 = vmatprep.subr.bf16.mxu0 0
        %333 = vmatpush1.bf16.msra.mxu0 0
        %334 = vmatprep.subr.bf16.mxu0 0
        %335 = vmatpush1.bf16.msra.mxu0 0
        %336 = vmatprep.subr.bf16.mxu0 0
        %337 = vmatpush1.bf16.msra.mxu0 0
        %338 = vmatprep.subr.bf16.mxu0 0
        %339 = vmatpush1.bf16.msra.mxu0 %v322
        %340 = vmatprep.subr.bf16.mxu0 0
        %341 = vmatpush2.bf16.msra.mxu0 0
        %342 = vmatprep.subr.bf16.mxu0 0
        %343 = vmatpush2.bf16.msra.mxu0 0
        %344 = vmatprep.subr.bf16.mxu0 0
        %345 = vmatpush2.bf16.msra.mxu0 0
        %346 = vmatprep.subr.bf16.mxu0 0
        %347 = vmatpush2.bf16.msra.mxu0 0
        %348 = vmatprep.subr.bf16.mxu0 0
        %349 = vmatpush2.bf16.msra.mxu0 0
        %350 = vmatprep.subr.bf16.mxu0 0
        %351 = vmatpush2.bf16.msra.mxu0 0
        %352 = vmatprep.subr.bf16.mxu0 0
        %353 = vmatpush2.bf16.msra.mxu0 0
        %354 = vmatprep.subr.bf16.mxu0 0
        %355 = vmatpush2.bf16.msra.mxu0 0
        %356 = vmatprep.mubr.bf16.mxu0 0
        %357 = vmatmul.mubr.bf16.gmra.mxu0 %v318
        %v358 = vpop.f32.mrf.mxu0
        %v359 = vadd.f32 0.0, %v358
        %v360 = vpop.f32.mrf.mxu0
        %v361 = vpop.f32.mrf.mxu0
        %v362 = vpop.f32.mrf.mxu0
        %363 = vdwg.mxu0
        %v364 = vpack.c.bf16 %v359, %v359
        %vm365 = vcmask 257024
        %366 = vst.msk [vmem:[%s134] sm:$0xf] %vm365, %v364
        %s367 = sand.u32 %s71, 1
        %s368 = scalar_lea.sflag [#allocation3], %s367
        %s369 = sand.u32 %s71, 1
        %s370 = smul.addr %s369, 4
        %s371 = scalar_lea.vmem [#allocation2], %s370
        // Predicated region
        $region29: #{tpu_custom_call.1} parent=27 // pred_check
          %p372 = pneg %p81
        $region30: #{tpu_custom_call.1} parent=27 // pred_check_branch
          %374 = sbr.rel (%p372) target = $region32
        $region31: #{tpu_custom_call.1} parent=27 // pred_region
          %s376 = ssub.s32 64, 64
          %377 = vsyncadd %s368, %s376
          %s378 = smul.addr %s16, 64
          %s379 = scalar_lea.hbm %s2, %s378
          %s381 = sshll.u32 %s371, 4
          %s382 = int_to_ptr.vmem [resolvable:$true] %s381
          %384 = dma.vmem_to_hbm [thread:$0]  %s382, 64, %s379, %s368
        $region32: #{tpu_custom_call.1} parent=27 // pred_fallthru
          _
      $region28: #{tpu_custom_call.1} parent=5 // pred_fallthru
        _
      %p385 = scmp.le.s32.totalorder 2, %s11
      // Predicated region
      $region33: #{tpu_custom_call.1} parent=5 // pred_check
        %p386 = pneg %p385
      $region34: #{tpu_custom_call.1} parent=5 // pred_check_branch
        %388 = sbr.rel (%p386) target = $region36
      $region35: #{tpu_custom_call.1} parent=5 // pred_region
        %s389 = ssub.s32 %s11, 2
        // Predicated region
        $region37: #{tpu_custom_call.1} parent=35 // pred_check
          %p390 = pneg %p87
        $region38: #{tpu_custom_call.1} parent=35 // pred_check_branch
          %392 = sbr.rel (%p390) target = $region40
        $region39: #{tpu_custom_call.1} parent=35 // pred_region
          %s393 = sand.u32 %s72, 1
          %s394 = scalar_lea.sflag [#allocation3], %s393
          %s395 = sand.u32 %s72, 1
          %s396 = smul.addr %s395, 4
          %s397 = scalar_lea.vmem [#allocation2], %s396
          %398 = dma.done %s394, 64
        $region40: #{tpu_custom_call.1} parent=35 // pred_fallthru
          _
      $region36: #{tpu_custom_call.1} parent=5 // pred_fallthru
        _
    $region6: #{tpu_custom_call.1} parent=1 // loop_footer
      %s15 = sadd.s32 1, %s11
    $region7: #{tpu_custom_call.1} parent=1 // loop_footer_branch
      %10 = sbr.rel target = $region3
    $region8: #{tpu_custom_call.1} parent=1 // loop_exit
      _
    %399 = vsyncpa [#allocation3], 1
    %s400 = scalar_lea.sflag [#allocation3], 1
    %401 = vsyncpa %s400, 1

</llo_original>
